<compile_context>
chip_gen: v7x
topology: tpu7x:2x2x1
jax: 0.10.0
libtpu: 0.0.40
codegen_flags: <defaults>
</compile_context>

<pallas_src>
import jax
import jax.numpy as jnp
from jax.experimental import pallas as pl
from jax.experimental.pallas import tpu as pltpu

_LANES = 128
# ~2 MiB per block at f32 compute width (4096 rows x 128 lanes x 4 B).
# f32 I/O -> 2 MiB blocks, bf16 I/O -> 1 MiB blocks; both in the measured
# 1-4 MiB sweet spot, and 4096 is a multiple of every sublane pack (8/16/32).
_TARGET_BLOCK_ROWS = (2 * 1024 * 1024) // (_LANES * 4)  # 4096


def _logistic_kernel(scal_ref, x_ref, o_ref):
    # scal_ref: (2,) f32 in SMEM holding [a, b] with a = -k, b = k*x0.
    # x_ref / o_ref: (block_rows, 128) tiles in VMEM, native dtype.
    a = scal_ref[0]
    b = scal_ref[1]
    x = x_ref[...].astype(jnp.float32)
    # Exact sigmoid: exp on the EUP, exact reciprocal (kernel is HBM-bound,
    # so the exact divide costs zero wall-clock and matches torch.sigmoid).
    sig = 1.0 / (1.0 + jnp.exp(a * x + b))      # == sigmoid(k * (x - x0))
    o_ref[...] = jnp.clip(sig, 0.0, 1.0).astype(o_ref.dtype)


def logistic_activation(x, k, x0=0.0):
    """Applies clamp(sigmoid(k * (x - x0)), 0, 1).squeeze() elementwise."""
    x = jnp.asarray(x)
    if not jnp.issubdtype(x.dtype, jnp.floating):
        x = x.astype(jnp.float32)
    out_dtype = x.dtype
    orig_shape = x.shape

    x_flat = x.reshape(-1)
    n = x_flat.shape[0]
    if n == 0:
        return jnp.squeeze(jnp.clip(x, 0.0, 1.0))

    rem = n % _LANES
    if rem:
        # TODO(synk): ragged (n % 128 != 0) inputs still pay one XLA pad +
        # slice pass; the lane-aligned common case below is pad/slice free.
        x_flat = jnp.pad(x_flat, (0, _LANES - rem))
    rows = x_flat.shape[0] // _LANES
    x2d = x_flat.reshape(rows, _LANES)

    # Full-extent block if everything fits in one target tile (full-dim blocks
    # are exempt from the (8,128) divisibility rule); otherwise the
    # bandwidth-optimal ~2 MiB tile. Last block may be partial (Pallas masks).
    block_rows = min(rows, _TARGET_BLOCK_ROWS)
    grid = (pl.cdiv(rows, block_rows),)

    # Hoist scalar algebra: -k*(x - x0) == a*x + b with a = -k, b = k*x0.
    k_f = jnp.asarray(k, dtype=jnp.float32).reshape(-1)[0]
    x0_f = jnp.asarray(x0, dtype=jnp.float32).reshape(-1)[0]
    scal = jnp.stack([-k_f, k_f * x0_f])

    out2d = pl.pallas_call(
        _logistic_kernel,
        out_shape=jax.ShapeDtypeStruct((rows, _LANES), out_dtype),
        grid=grid,
        in_specs=[
            pl.BlockSpec(memory_space=pltpu.MemorySpace.SMEM),       # [a, b]
            pl.BlockSpec((block_rows, _LANES), lambda i: (i, 0)),    # x tile
        ],
        out_specs=pl.BlockSpec((block_rows, _LANES), lambda i: (i, 0)),
        compiler_params=pltpu.CompilerParams(
            dimension_semantics=("parallel",),     # v7x megacore sharding
            vmem_limit_bytes=32 * 1024 * 1024,     # safe on v5e/v6e/v7x
        ),
    )(scal, x2d)

    out_flat = out2d.reshape(-1)
    if rem:
        out_flat = out_flat[:n]
    out = out_flat.reshape(orig_shape)
    # torch's .squeeze(): drop all size-1 dims.
    return jnp.squeeze(out)


if __name__ == "__main__":
    key = jax.random.PRNGKey(0)
    k1, k2 = jax.random.split(key)

    # Deterministic parameter init per __init__: x0=0, k=1 (trainable flag off).
    x0 = 0.0
    k = jnp.array([1.0], dtype=jnp.float32)

    def ref_fn(xf, k_, x0_):
        return jnp.squeeze(jnp.clip(1.0 / (1.0 + jnp.exp(-k_ * (xf - x0_))), 0.0, 1.0))

    # 1) Main NCHW case, f32 (module's (N, *) contract) — pad-free path.
    x = jax.random.normal(k1, (2, 4, 16, 16), dtype=jnp.float32)
    out = jax.block_until_ready(logistic_activation(x, k, x0))
    ref = ref_fn(x, 1.0, 0.0)
    assert out.shape == ref.shape
    assert float(jnp.max(jnp.abs(out - ref))) < 2e-3

    # 2) Ragged shape exercising the pad / tail-slice path, non-default k, x0.
    x_r = jax.random.normal(k2, (2, 4, 30, 33), dtype=jnp.float32) * 3.0
    out_r = jax.block_until_ready(logistic_activation(x_r, 2.0, 0.5))
    ref_r = ref_fn(x_r, 2.0, 0.5)
    assert out_r.shape == ref_r.shape
    assert float(jnp.max(jnp.abs(out_r - ref_r))) < 2e-3

    # 3) bf16 input: HBM traffic stays bf16, math is f32 inside the kernel.
    x_b = x.astype(jnp.bfloat16)
    out_b = jax.block_until_ready(logistic_activation(x_b, k, x0))
    ref_b = ref_fn(x_b.astype(jnp.float32), 1.0, 0.0)
    assert out_b.dtype == jnp.bfloat16 and out_b.shape == ref_b.shape
    assert float(jnp.max(jnp.abs(out_b.astype(jnp.float32) - ref_b))) < 1e-2

    print("KERNEL_OK")
</pallas_src>

<mosaic_0001>
module attributes {stable_mosaic.version = 11 : i64} {
  func.func @_logistic_kernel(%arg0: i32, %arg1: memref<2xf32, #tpu.memory_space<smem>>, %arg2: memref<16x128xf32, #tpu.memory_space<vmem>>, %arg3: memref<16x128xf32, #tpu.memory_space<vmem>>) attributes {dimension_semantics = [#tpu.dimension_semantics<parallel>], iteration_bounds = array<i64: 1>, scalar_prefetch = 0 : i64, scratch_operands = 0 : i64, tpu.core_type = #tpu.core_type<tc>, window_params = [{transform_indices = @transform_0, window_bounds = array<i64: 2>}, {transform_indices = @transform_1, window_bounds = array<i64: 16, 128>}, {transform_indices = @transform_2, window_bounds = array<i64: 16, 128>}]} {
    %c0 = arith.constant 0 : index
    %0 = memref.load %arg1[%c0] : memref<2xf32, #tpu.memory_space<smem>>
    %c1 = arith.constant 1 : index
    %1 = memref.load %arg1[%c1] : memref<2xf32, #tpu.memory_space<smem>>
    %c0_0 = arith.constant 0 : index
    %c0_1 = arith.constant 0 : index
    %2 = vector.load %arg2[%c0_0, %c0_1] : memref<16x128xf32, #tpu.memory_space<vmem>>, vector<16x128xf32>
    %3 = vector.broadcast %0 : f32 to vector<16x128xf32>
    %4 = arith.mulf %3, %2 : vector<16x128xf32>
    %5 = vector.broadcast %1 : f32 to vector<16x128xf32>
    %6 = arith.addf %4, %5 : vector<16x128xf32>
    %7 = math.exp %6 : vector<16x128xf32>
    %cst = arith.constant 1.000000e+00 : f32
    %8 = vector.broadcast %cst : f32 to vector<16x128xf32>
    %9 = arith.addf %8, %7 : vector<16x128xf32>
    %cst_2 = arith.constant 1.000000e+00 : f32
    %10 = vector.broadcast %cst_2 : f32 to vector<16x128xf32>
    %11 = arith.divf %10, %9 : vector<16x128xf32>
    %cst_3 = arith.constant 0.000000e+00 : f32
    %cst_4 = arith.constant 1.000000e+00 : f32
    %12 = vector.broadcast %cst_3 : f32 to vector<16x128xf32>
    %13 = arith.maximumf %12, %11 : vector<16x128xf32>
    %14 = vector.broadcast %cst_4 : f32 to vector<16x128xf32>
    %15 = arith.minimumf %14, %13 : vector<16x128xf32>
    %c0_5 = arith.constant 0 : index
    %c0_6 = arith.constant 0 : index
    %16 = vector.load %arg3[%c0_5, %c0_6] : memref<16x128xf32, #tpu.memory_space<vmem>>, vector<16x128xf32>
    tpu.vector_store %arg3[%c0_5, %c0_6], %15 {strides = array<i32>} : memref<16x128xf32, #tpu.memory_space<vmem>>, vector<16x128xf32>,
    return
  }
  func.func @transform_0(%arg0: i32) -> i32 {
    %c0_i32 = arith.constant 0 : i32
    %c0_i32_0 = arith.constant 0 : i32
    return %c0_i32 : i32
  }
  func.func @transform_1(%arg0: i32) -> (i32, i32) {
    %c0_i32 = arith.constant 0 : i32
    %c0_i32_0 = arith.constant 0 : i32
    return %arg0, %c0_i32 : i32, i32
  }
  func.func @transform_2(%arg0: i32) -> (i32, i32) {
    %c0_i32 = arith.constant 0 : i32
    %c0_i32_0 = arith.constant 0 : i32
    return %arg0, %c0_i32 : i32, i32
  }
}

</mosaic_0001>

<llo_original>
// kernel: tpu_custom_call.1
$region0: #{tpu_custom_call.1}
  #allocation0 [shape = 'u32[]', space=smem, size = 0x4, offset = 0x4, fixed_abs, tag = 'smem constant byte address 0x4 - core index']
  #allocation1 [shape = 'u32[144,128]{1,0:T(1,128)}', space=vmem, size = 0x12000, scoped, tag = 'internal scratch']
  %s0 = inlined_call_operand.hbm [shape: f32[2], index: 0, kind: input, shape index: {}]
  %s1 = inlined_call_operand.hbm [shape: f32[16,128], index: 1, kind: input, shape index: {}]
  %s2 = inlined_call_operand.hbm [shape: f32[16,128], index: 2, kind: output, shape index: {}]
  %s3 = sld [smem:[#allocation0]]
  $region26: #{tpu_custom_call.1} parent=0
    _
  %s5 = ssub.s32 1, %s3
  %s6 = scalar_select 0, %s5, %s3
  $region1: #{tpu_custom_call.1} parent=0
    #allocation2 [shape = 'u8[512]{0}', space=smem, size = 0x200, scoped, tag = 'input window, operand 0, single buffered']
    #allocation3 [shape = 's32[1]{0}', space=sflag, size = 0x4, scoped, tag = 'scoped memory for tpu_custom_call.1']
    #allocation4 [shape = 's32[1]{0}', space=sflag, size = 0x4, scoped, tag = 'scoped memory for tpu_custom_call.1']
    #allocation5 [shape = 's32[1]{0}', space=sflag, size = 0x4, scoped, tag = 'scoped memory for tpu_custom_call.1']
    #allocation6 [shape = 'u8[8192]{0}', space=vmem, size = 0x2000, scoped, tag = 'input window, operand 1, single buffered']
    #allocation7 [shape = 'u8[8192]{0}', space=vmem, size = 0x2000, scoped, tag = 'output window, operand 0, single buffered']
    %7 = vsyncpa [#allocation5], 0
    %8 = vsyncpa [#allocation3], 0
    %9 = vsyncpa [#allocation4], 0
    // Predicated region
    $region2: #{tpu_custom_call.1} parent=1 // pred_check
      _
    $region3: #{tpu_custom_call.1} parent=1 // pred_check_branch
      %11 = sbr.rel (0) target = $region5
    $region4: #{tpu_custom_call.1} parent=1 // pred_region
      %s13 = ssub.s32 16, 16
      %14 = vsyncadd [#allocation5], %s13
      %17 = dma.hbm_to_smem %s0, 16, [#allocation2], [#allocation5]
    $region5: #{tpu_custom_call.1} parent=1 // pred_fallthru
      _
    // Predicated region
    $region6: #{tpu_custom_call.1} parent=1 // pred_check
      _
    $region7: #{tpu_custom_call.1} parent=1 // pred_check_branch
      %19 = sbr.rel (0) target = $region9
    $region8: #{tpu_custom_call.1} parent=1 // pred_region
      %s21 = ssub.s32 256, 256
      %22 = vsyncadd [#allocation3], %s21
      %s23 = sshll.u32 [#allocation6], 4
      %s24 = int_to_ptr.vmem [resolvable:$true] %s23
      %29 = dma.hbm_to_vmem [thread:$0]  %s1, 256, %s24, [#allocation3], 128, 128, 8
    $region9: #{tpu_custom_call.1} parent=1 // pred_fallthru
      _
    // Predicated region
    $region10: #{tpu_custom_call.1} parent=1 // pred_check
      _
    $region11: #{tpu_custom_call.1} parent=1 // pred_check_branch
      %31 = sbr.rel (0) target = $region13
    $region12: #{tpu_custom_call.1} parent=1 // pred_region
      %32 = dma.done [#allocation5], 16
    $region13: #{tpu_custom_call.1} parent=1 // pred_fallthru
      _
    // Predicated region
    $region14: #{tpu_custom_call.1} parent=1 // pred_check
      _
    $region15: #{tpu_custom_call.1} parent=1 // pred_check_branch
      %34 = sbr.rel (0) target = $region17
    $region16: #{tpu_custom_call.1} parent=1 // pred_region
      %35 = dma.done [#allocation3], 256
    $region17: #{tpu_custom_call.1} parent=1 // pred_fallthru
      _
    %36 = sfence
    %s37 = sld [smem:[#allocation2]]
    %s38 = sld [smem:[#allocation2 + $0x1]]
    %v39 = vld [vmem:[#allocation6] sm:$0xff]
    %v40 = vld [vmem:[#allocation6 + $0x8] sm:$0xff]
    %v41 = vstv %s37
    %v42 = vmul.f32 %v41, %v39
    %v43 = vmul.f32 %v41, %v40
    %v44 = vstv %s38
    %v45 = vadd.f32 %v42, %v44
    %v46 = vadd.f32 %v43, %v44
    %v47 = vmul.f32 %v45, 1.442695
    %v48 = vpow.pop %v47
    %v49 = vmul.f32 %v46, 1.442695
    %v50 = vpow.pop %v49
    %v51 = vadd.f32 %v48, 1.0
    %v52 = vadd.f32 %v50, 1.0
    %v53 = vrcp.pop %v51
    %v54 = vmul.f32 1.0, %v53
    %v55 = vrcp.pop %v52
    %v56 = vmul.f32 1.0, %v55
    %v57 = vmax.f32 %v54, 0.0
    %v58 = vmax.f32 %v56, 0.0
    %v59 = vmin.f32 %v57, 1.0
    %v60 = vmin.f32 %v58, 1.0
    %61 = vst [vmem:[#allocation7] sm:$0xff] %v59
    %62 = vst [vmem:[#allocation7 + $0x8] sm:$0xff] %v60
    // Predicated region
    $region18: #{tpu_custom_call.1} parent=1 // pred_check
      _
    $region19: #{tpu_custom_call.1} parent=1 // pred_check_branch
      %64 = sbr.rel (0) target = $region21
    $region20: #{tpu_custom_call.1} parent=1 // pred_region
      %s66 = ssub.s32 256, 256
      %67 = vsyncadd [#allocation4], %s66
      %s68 = sshll.u32 [#allocation7], 4
      %s69 = int_to_ptr.vmem [resolvable:$true] %s68
      %74 = dma.vmem_to_hbm [thread:$0]  %s69, 256, %s2, [#allocation4], 128, 128, 8
    $region21: #{tpu_custom_call.1} parent=1 // pred_fallthru
      _
    // Predicated region
    $region22: #{tpu_custom_call.1} parent=1 // pred_check
      _
    $region23: #{tpu_custom_call.1} parent=1 // pred_check_branch
      %76 = sbr.rel (0) target = $region25
    $region24: #{tpu_custom_call.1} parent=1 // pred_region
      %77 = dma.done [#allocation4], 256
    $region25: #{tpu_custom_call.1} parent=1 // pred_fallthru
      _
    %78 = vsyncpa [#allocation3], 1
    %79 = vsyncpa [#allocation4], 1
    %80 = vsyncpa [#allocation5], 1

</llo_original>
